<compile_context>
chip_gen: v5e
topology: v5e:2x2
jax: 0.10.0
libtpu: 0.0.40
codegen_flags: <defaults>
</compile_context>

<pallas_src>
import jax
import jax.numpy as jnp
from jax.experimental import pallas as pl
from jax.experimental.pallas import tpu as pltpu


# ---------------------------------------------------------------------------
# Generation-aware scoped-VMEM limit (v5e/v6e: 128 MiB physical, v7x: 64 MiB).
# ---------------------------------------------------------------------------
def _vmem_limit_bytes():
    phys = 128 * 1024 * 1024
    try:
        phys = int(pltpu.get_tpu_info().vmem_capacity_bytes)
    except Exception:
        pass
    if phys >= 128 * 1024 * 1024:
        return 96 * 1024 * 1024      # v5e / v6e: plenty of headroom for big tiles
    return 48 * 1024 * 1024          # v7x: 64 MiB physical; leave room for buffers


def _pick_tile(dim, candidates):
    """Largest candidate tile that divides `dim`; fall back to the full dim."""
    for c in candidates:
        if c <= dim and dim % c == 0:
            return c
    return dim


def _vmem_spec():
    return pl.BlockSpec(memory_space=pltpu.MemorySpace.VMEM)


def _smem_spec():
    return pl.BlockSpec(memory_space=pltpu.MemorySpace.SMEM)


# ---------------------------------------------------------------------------
# Kernel 1: patch embedding = unfolded-conv matmul + bias  (tiled, pipelined)
#   x: [M, K] bf16   w: [K, HID] bf16   b: [1, HID] f32  ->  o: [M, HID] bf16
# ---------------------------------------------------------------------------
def patch_embed_kernel(x_ref, w_ref, b_ref, o_ref, acc_ref):
    k = pl.program_id(2)

    @pl.when(k == 0)
    def _():
        # fold the bias into the accumulator init instead of an epilogue add
        acc_ref[...] = jnp.broadcast_to(b_ref[...], acc_ref.shape)

    acc_ref[...] += jnp.dot(
        x_ref[...], w_ref[...], preferred_element_type=jnp.float32
    )

    @pl.when(k == pl.num_programs(2) - 1)
    def _():
        o_ref[...] = acc_ref[...].astype(o_ref.dtype)


def patch_embed(patches, w, b):
    M, K = patches.shape
    H = w.shape[1]
    # Large tiles matched to the 256x256 MXU (v6e/v7x) and the HBM roofline;
    # fall back to the full (small) dim when it does not divide.
    tm = _pick_tile(M, (512, 256, 128, 64, 32, 16, 8))
    tk = _pick_tile(K, (512, 256, 128))
    tn = _pick_tile(H, (512, 256, 128))
    assert M % tm == 0 and K % tk == 0 and H % tn == 0

    x = patches.astype(jnp.bfloat16)
    wb = w.astype(jnp.bfloat16)

    grid = (M // tm, H // tn, K // tk)
    return pl.pallas_call(
        patch_embed_kernel,
        out_shape=jax.ShapeDtypeStruct((M, H), jnp.bfloat16),
        grid_spec=pltpu.PrefetchScalarGridSpec(
            num_scalar_prefetch=0,
            grid=grid,
            in_specs=[
                pl.BlockSpec((tm, tk), lambda i, j, k: (i, k)),
                pl.BlockSpec((tk, tn), lambda i, j, k: (k, j)),
                pl.BlockSpec((1, tn), lambda i, j, k: (0, j)),
            ],
            out_specs=pl.BlockSpec((tm, tn), lambda i, j, k: (i, j)),
            scratch_shapes=[pltpu.VMEM((tm, tn), jnp.float32)],
        ),
        compiler_params=pltpu.CompilerParams(
            dimension_semantics=("parallel", "parallel", "arbitrary"),
            vmem_limit_bytes=_vmem_limit_bytes(),
        ),
    )(x, wb, b)


# ---------------------------------------------------------------------------
# Kernel 2 (shared by image & text paths): mean-pool + projection + L2-norm.
#   tokens: [R, N, HID] bf16   w_proj: [HID, E] bf16   ->   emb: [R, E] f32
# Gridded over R (row) tiles -> pipelined DMAs, bounded VMEM, "parallel" axis
# for megacore sharding on v7x.  Pooling is an f32 sum over the token axis
# scaled by an f32 1/N constant (no dense pooling matrices).
# ---------------------------------------------------------------------------
def _make_pool_proj_norm_kernel(inv_n):
    def kernel(tok_ref, w_ref, o_ref):
        pooled = jnp.sum(tok_ref[...].astype(jnp.float32), axis=1) * inv_n  # [tr, HID]
        proj = jnp.dot(
            pooled.astype(jnp.bfloat16), w_ref[...],
            preferred_element_type=jnp.float32,
        )                                                                   # [tr, E]
        emb = proj * jax.lax.rsqrt(
            jnp.sum(proj * proj, axis=-1, keepdims=True) + 1e-8
        )
        o_ref[...] = emb
    return kernel


def pool_proj_norm(tokens, w_proj):
    R, N, HID = tokens.shape
    E = w_proj.shape[1]
    tr = R if R <= 64 else _pick_tile(R, (64, 32, 16, 8))
    assert R % tr == 0

    kernel = _make_pool_proj_norm_kernel(float(1.0 / N))
    return pl.pallas_call(
        kernel,
        out_shape=jax.ShapeDtypeStruct((R, E), jnp.float32),
        grid_spec=pltpu.PrefetchScalarGridSpec(
            num_scalar_prefetch=0,
            grid=(R // tr,),
            in_specs=[
                pl.BlockSpec((tr, N, HID), lambda i: (i, 0, 0)),
                pl.BlockSpec((HID, E), lambda i: (0, 0)),
            ],
            out_specs=pl.BlockSpec((tr, E), lambda i: (i, 0)),
        ),
        compiler_params=pltpu.CompilerParams(
            dimension_semantics=("parallel",),
            vmem_limit_bytes=_vmem_limit_bytes(),
        ),
    )(tokens.astype(jnp.bfloat16), w_proj.astype(jnp.bfloat16))


# ---------------------------------------------------------------------------
# Kernel 3: similarity logits + padded-text masking + row softmax.
#   img_emb: [B, E] f32   txt_emb: [Tp, E] f32 (Tp is 128-padded, lane-dense)
#   scale, n_texts in SMEM.   out: [B, Tp] f32 softmax over first n_texts cols.
# ---------------------------------------------------------------------------
def sim_softmax_kernel(scale_ref, ntxt_ref, img_ref, txt_ref, o_ref):
    # logits = scale * img @ txt^T (contract last-with-last -> MXU trans_b path,
    # no explicit XLU transpose of txt_emb).
    logits = scale_ref[0, 0] * jax.lax.dot_general(
        img_ref[...], txt_ref[...],
        dimension_numbers=(((1,), (1,)), ((), ())),
        preferred_element_type=jnp.float32,
    )                                                        # [B, Tp]

    n = jnp.maximum(ntxt_ref[0, 0], 1)                       # guard n_texts == 0
    col = jax.lax.broadcasted_iota(jnp.int32, logits.shape, 1)
    logits = jnp.where(col < n, logits, -jnp.inf)

    m = jnp.max(logits, axis=-1, keepdims=True)
    e = jnp.exp(logits - m)
    denom = jnp.sum(e, axis=-1, keepdims=True)
    o_ref[...] = e / denom                                   # exact divide (not approx)


def sim_softmax(img_emb, txt_emb, logit_scale, n_texts):
    B = img_emb.shape[0]
    Tp = txt_emb.shape[0]
    scale_arr = jnp.asarray(logit_scale, jnp.float32).reshape(1, 1)
    n_arr = jnp.full((1, 1), n_texts, jnp.int32)
    return pl.pallas_call(
        sim_softmax_kernel,
        out_shape=jax.ShapeDtypeStruct((B, Tp), jnp.float32),
        in_specs=[_smem_spec(), _smem_spec(), _vmem_spec(), _vmem_spec()],
        out_specs=_vmem_spec(),
        compiler_params=pltpu.CompilerParams(vmem_limit_bytes=_vmem_limit_bytes()),
    )(scale_arr, n_arr, img_emb, txt_emb)


# ---------------------------------------------------------------------------
# Full forward: mirrors AltClip.forward -> softmax(logits_per_image, dim=1)
# ---------------------------------------------------------------------------
def altclip_forward(image, text_ids, params, patch=8):
    w_patch, b_patch, w_img_proj, tok_emb, w_txt_proj, logit_scale = params
    B, C, Himg, Wimg = image.shape
    P = patch
    nph, npw = Himg // P, Wimg // P
    NP = nph * npw

    # --- image encoder ---
    # TODO(synk): express this im2col via a BlockSpec index_map inside patch_embed
    # at real resolution instead of a wrapper reshape/transpose.
    patches = image.reshape(B, C, nph, P, npw, P).transpose(0, 2, 4, 1, 3, 5)
    patches = patches.reshape(B * NP, C * P * P)
    img_tokens = patch_embed(patches, w_patch, b_patch)          # [B*NP, HID] bf16
    HID = img_tokens.shape[-1]
    img_tokens = img_tokens.reshape(B, NP, HID)                  # [B, NP, HID]

    # --- text encoder inputs ---
    # TODO(synk): move this embedding gather into the kernel (PrefetchScalarGridSpec
    # row-gather) instead of an XLA jnp.take.
    T, L = text_ids.shape
    txt_tokens = jnp.take(tok_emb, text_ids, axis=0).astype(jnp.bfloat16)  # [T, L, HID]
    T_pad = ((T + 127) // 128) * 128                             # lane-dense text axis
    txt_tokens = jnp.pad(txt_tokens, ((0, T_pad - T), (0, 0), (0, 0)))

    # --- pool + project + L2-normalize (one gridded kernel, used twice) ---
    img_emb = pool_proj_norm(img_tokens, w_img_proj)             # [B, E]    f32
    txt_emb = pool_proj_norm(txt_tokens, w_txt_proj)             # [T_pad,E] f32

    # --- similarity + masked softmax over texts ---
    probs_pad = sim_softmax(img_emb, txt_emb, logit_scale, T)    # [B, T_pad]
    return probs_pad[:, :T]                                      # [B, T]


# ---------------------------------------------------------------------------
# Pure-JAX reference (mirrors the kernel's bf16 operand casts) for validation.
# ---------------------------------------------------------------------------
def reference_forward(image, text_ids, params, patch=8):
    w_patch, b_patch, w_img_proj, tok_emb, w_txt_proj, logit_scale = params
    B, C, Himg, Wimg = image.shape
    P = patch
    nph, npw = Himg // P, Wimg // P
    NP = nph * npw

    patches = image.reshape(B, C, nph, P, npw, P).transpose(0, 2, 4, 1, 3, 5)
    patches = patches.reshape(B * NP, C * P * P)
    tok = jnp.dot(patches.astype(jnp.bfloat16), w_patch.astype(jnp.bfloat16),
                  preferred_element_type=jnp.float32) + b_patch
    tok = tok.astype(jnp.bfloat16).astype(jnp.float32).reshape(B, NP, -1)
    img_pooled = jnp.mean(tok, axis=1)
    img_proj = jnp.dot(img_pooled.astype(jnp.bfloat16),
                       w_img_proj.astype(jnp.bfloat16),
                       preferred_element_type=jnp.float32)
    img_emb = img_proj / jnp.sqrt(jnp.sum(img_proj ** 2, -1, keepdims=True) + 1e-8)

    txt_tok = jnp.take(tok_emb, text_ids, axis=0).astype(jnp.bfloat16).astype(jnp.float32)
    txt_pooled = jnp.mean(txt_tok, axis=1)
    txt_proj = jnp.dot(txt_pooled.astype(jnp.bfloat16),
                       w_txt_proj.astype(jnp.bfloat16),
                       preferred_element_type=jnp.float32)
    txt_emb = txt_proj / jnp.sqrt(jnp.sum(txt_proj ** 2, -1, keepdims=True) + 1e-8)

    logits = logit_scale[0, 0] * (img_emb @ txt_emb.T)
    return jax.nn.softmax(logits, axis=1)


if __name__ == "__main__":
    key = jax.random.PRNGKey(0)
    k = jax.random.split(key, 6)

    # Small shapes consistent with the module's forward
    B, C, H, W = 2, 4, 16, 16     # images (NCHW, like PyTorch)
    P = 8                         # patch size -> 4 patches per image
    T, L, V = 3, 8, 32            # num texts, seq length, vocab size
    HID, E = 128, 128             # lane-dense hidden / joint embedding dims

    image = jax.random.normal(k[0], (B, C, H, W), jnp.float32)
    text_ids = jax.random.randint(k[1], (T, L), 0, V)

    patch_dim = C * P * P
    w_patch = 0.02 * jax.random.normal(k[2], (patch_dim, HID), jnp.float32)
    b_patch = jnp.zeros((1, HID), jnp.float32)
    w_img_proj = 0.02 * jax.random.normal(k[3], (HID, E), jnp.float32)
    tok_emb = 0.02 * jax.random.normal(k[4], (V, HID), jnp.float32)
    w_txt_proj = 0.02 * jax.random.normal(k[5], (HID, E), jnp.float32)
    logit_scale = jnp.array([[100.0]], jnp.float32)   # exp(learned logit scale)

    params = (w_patch, b_patch, w_img_proj, tok_emb, w_txt_proj, logit_scale)

    probs = altclip_forward(image, text_ids, params, patch=P)
    jax.block_until_ready(probs)

    assert probs.shape == (B, T)
    # rows of a softmax must sum to 1 (exact divide in-kernel)
    assert bool(jnp.allclose(jnp.sum(probs, axis=1), 1.0, atol=1e-5))
    # match the pure-JAX reference
    ref = reference_forward(image, text_ids, params, patch=P)
    assert bool(jnp.allclose(probs, ref, atol=2e-2)), (probs, ref)
    print("KERNEL_OK")
</pallas_src>

<mosaic_0001>
module attributes {stable_mosaic.version = 11 : i64} {
  func.func @patch_embed_kernel(%arg0: i32, %arg1: i32, %arg2: i32, %arg3: memref<8x256xbf16, #tpu.memory_space<vmem>>, %arg4: memref<256x128xbf16, #tpu.memory_space<vmem>>, %arg5: memref<1x128xf32, #tpu.memory_space<vmem>>, %arg6: memref<8x128xbf16, #tpu.memory_space<vmem>>, %arg7: memref<8x128xf32, #tpu.memory_space<vmem>>) attributes {dimension_semantics = [#tpu.dimension_semantics<parallel>, #tpu.dimension_semantics<parallel>, #tpu.dimension_semantics<arbitrary>], iteration_bounds = array<i64: 1, 1, 1>, scalar_prefetch = 0 : i64, scratch_operands = 1 : i64, tpu.core_type = #tpu.core_type<tc>, window_params = [{transform_indices = @transform_0, window_bounds = array<i64: 8, 256>}, {transform_indices = @transform_1, window_bounds = array<i64: 256, 128>}, {transform_indices = @transform_2, window_bounds = array<i64: 1, 128>}, {transform_indices = @transform_3, window_bounds = array<i64: 8, 128>}]} {
    %c0_i32 = arith.constant 0 : i32
    %0 = arith.cmpi eq, %arg2, %c0_i32 : i32
    %1 = arith.extui %0 : i1 to i32
    %c0_i32_0 = arith.constant 0 : i32
    %2 = arith.cmpi ne, %1, %c0_i32_0 : i32
    scf.if %2 {
      %c0_10 = arith.constant 0 : index
      %c0_11 = arith.constant 0 : index
      %12 = vector.load %arg5[%c0_10, %c0_11] : memref<1x128xf32, #tpu.memory_space<vmem>>, vector<1x128xf32>
      %13 = vector.shape_cast %12 : vector<1x128xf32> to vector<1x128xf32>
      %14 = vector.broadcast %13 : vector<1x128xf32> to vector<8x128xf32>
      %c0_12 = arith.constant 0 : index
      %c0_13 = arith.constant 0 : index
      %15 = vector.load %arg7[%c0_12, %c0_13] : memref<8x128xf32, #tpu.memory_space<vmem>>, vector<8x128xf32>
      tpu.vector_store %arg7[%c0_12, %c0_13], %14 {strides = array<i32>} : memref<8x128xf32, #tpu.memory_space<vmem>>, vector<8x128xf32>,
    } else {
    }
    %c0 = arith.constant 0 : index
    %c0_1 = arith.constant 0 : index
    %3 = vector.load %arg7[%c0, %c0_1] : memref<8x128xf32, #tpu.memory_space<vmem>>, vector<8x128xf32>
    %c0_2 = arith.constant 0 : index
    %c0_3 = arith.constant 0 : index
    %4 = vector.load %arg3[%c0_2, %c0_3] : memref<8x256xbf16, #tpu.memory_space<vmem>>, vector<8x256xbf16>
    %c0_4 = arith.constant 0 : index
    %c0_5 = arith.constant 0 : index
    %5 = vector.load %arg4[%c0_4, %c0_5] : memref<256x128xbf16, #tpu.memory_space<vmem>>, vector<256x128xbf16>
    %cst = arith.constant dense<0.000000e+00> : vector<8x128xf32>
    %6 = tpu.matmul %4, %5, %cst {dimension_numbers = #tpu.dot_dimension_numbers<[1], [0], [0], [1], [0, 0, 1, 1], [], []>} : vector<8x256xbf16>, vector<256x128xbf16>, vector<8x128xf32> -> vector<8x128xf32>
    %7 = arith.addf %3, %6 : vector<8x128xf32>
    %c0_6 = arith.constant 0 : index
    %c0_7 = arith.constant 0 : index
    %8 = vector.load %arg7[%c0_6, %c0_7] : memref<8x128xf32, #tpu.memory_space<vmem>>, vector<8x128xf32>
    tpu.vector_store %arg7[%c0_6, %c0_7], %7 {strides = array<i32>} : memref<8x128xf32, #tpu.memory_space<vmem>>, vector<8x128xf32>,
    %c0_i32_8 = arith.constant 0 : i32
    %9 = arith.cmpi eq, %arg2, %c0_i32_8 : i32
    %10 = arith.extui %9 : i1 to i32
    %c0_i32_9 = arith.constant 0 : i32
    %11 = arith.cmpi ne, %10, %c0_i32_9 : i32
    scf.if %11 {
      %c0_10 = arith.constant 0 : index
      %c0_11 = arith.constant 0 : index
      %12 = vector.load %arg7[%c0_10, %c0_11] : memref<8x128xf32, #tpu.memory_space<vmem>>, vector<8x128xf32>
      %13 = arith.truncf %12 : vector<8x128xf32> to vector<8x128xbf16>
      %c0_12 = arith.constant 0 : index
      %c0_13 = arith.constant 0 : index
      %14 = vector.load %arg6[%c0_12, %c0_13] : memref<8x128xbf16, #tpu.memory_space<vmem>>, vector<8x128xbf16>
      tpu.vector_store %arg6[%c0_12, %c0_13], %13 {strides = array<i32>} : memref<8x128xbf16, #tpu.memory_space<vmem>>, vector<8x128xbf16>,
    } else {
    }
    return
  }
  func.func @transform_0(%arg0: i32, %arg1: i32, %arg2: i32) -> (i32, i32) {
    %c0_i32 = arith.constant 0 : i32
    return %arg0, %arg2 : i32, i32
  }
  func.func @transform_1(%arg0: i32, %arg1: i32, %arg2: i32) -> (i32, i32) {
    %c0_i32 = arith.constant 0 : i32
    return %arg2, %arg1 : i32, i32
  }
  func.func @transform_2(%arg0: i32, %arg1: i32, %arg2: i32) -> (i32, i32) {
    %c0_i32 = arith.constant 0 : i32
    %c0_i32_0 = arith.constant 0 : i32
    return %c0_i32, %arg1 : i32, i32
  }
  func.func @transform_3(%arg0: i32, %arg1: i32, %arg2: i32) -> (i32, i32) {
    %c0_i32 = arith.constant 0 : i32
    return %arg0, %arg1 : i32, i32
  }
}

</mosaic_0001>

<llo_original>
// kernel: tpu_custom_call.1
$region0: #{tpu_custom_call.1}
  #allocation0 [shape = 'u32[]', space=smem, size = 0x4, offset = 0x4, fixed_abs, tag = 'smem constant byte address 0x4 - core index']
  #allocation1 [shape = 'u32[72,128]{1,0:T(1,128)}', space=vmem, size = 0x9000, scoped, tag = 'internal scratch']
  #allocation2 [shape = 'f32[8,128]{1,0:T(8,128)}', space=vmem, size = 0x1000, scoped, tag = 'scratch operand']
  %s0 = inlined_call_operand.hbm [shape: bf16[8,256], index: 0, kind: input, shape index: {}]
  %s1 = inlined_call_operand.hbm [shape: bf16[256,128], index: 1, kind: input, shape index: {}]
  %s2 = inlined_call_operand.vmem [shape: f32[1,128], index: 2, kind: input, shape index: {}]
  %s3 = inlined_call_operand.hbm [shape: bf16[8,128], index: 3, kind: output, shape index: {}]
  %s4 = sld [smem:[#allocation0]]
  $region38: #{tpu_custom_call.1} parent=0
    _
  %s6 = ssub.s32 1, %s4
  %s7 = scalar_select 0, %s6, %s4
  $region1: #{tpu_custom_call.1} parent=0
    #allocation3 [shape = 'u8[4096]{0}', space=vmem, size = 0x1000, scoped, tag = 'input window, operand 0, single buffered']
    #allocation4 [shape = 's32[1]{0}', space=sflag, size = 0x4, scoped, tag = 'scoped memory for tpu_custom_call.1']
    #allocation5 [shape = 's32[1]{0}', space=sflag, size = 0x4, scoped, tag = 'scoped memory for tpu_custom_call.1']
    #allocation6 [shape = 'u8[65536]{0}', space=vmem, size = 0x10000, scoped, tag = 'input window, operand 1, single buffered']
    #allocation7 [shape = 's32[1]{0}', space=sflag, size = 0x4, scoped, tag = 'scoped memory for tpu_custom_call.1']
    #allocation8 [shape = 'u8[2048]{0}', space=vmem, size = 0x800, scoped, tag = 'output window, operand 0, single buffered']
    %8 = vsyncpa [#allocation4], 0
    %9 = vsyncpa [#allocation7], 0
    %10 = vsyncpa [#allocation5], 0
    // Predicated region
    $region2: #{tpu_custom_call.1} parent=1 // pred_check
      _
    $region3: #{tpu_custom_call.1} parent=1 // pred_check_branch
      %12 = sbr.rel (0) target = $region5
    $region4: #{tpu_custom_call.1} parent=1 // pred_region
      %14 = vsyncadd [#allocation4], 0
      %s16 = sshll.u32 %s0, 4
      %s17 = int_to_ptr.hbm [resolvable:$true] %s16
      %s18 = sshll.u32 [#allocation3], 4
      %s19 = int_to_ptr.vmem [resolvable:$true] %s18
      %21 = dma.hbm_to_vmem [thread:$0]  %s17, 128, %s19, [#allocation4]
    $region5: #{tpu_custom_call.1} parent=1 // pred_fallthru
      _
    // Predicated region
    $region6: #{tpu_custom_call.1} parent=1 // pred_check
      _
    $region7: #{tpu_custom_call.1} parent=1 // pred_check_branch
      %23 = sbr.rel (0) target = $region9
    $region8: #{tpu_custom_call.1} parent=1 // pred_region
      %25 = vsyncadd [#allocation7], 0
      %s26 = sshll.u32 %s1, 4
      %s27 = int_to_ptr.hbm [resolvable:$true] %s26
      %s28 = sshll.u32 [#allocation6], 4
      %s29 = int_to_ptr.vmem [resolvable:$true] %s28
      %34 = dma.hbm_to_vmem [thread:$0]  %s27, 2048, %s29, [#allocation7], 64, 64, 4
    $region9: #{tpu_custom_call.1} parent=1 // pred_fallthru
      _
    // Predicated region
    $region10: #{tpu_custom_call.1} parent=1 // pred_check
      _
    $region11: #{tpu_custom_call.1} parent=1 // pred_check_branch
      %36 = sbr.rel (0) target = $region13
    $region12: #{tpu_custom_call.1} parent=1 // pred_region
      _
    $region13: #{tpu_custom_call.1} parent=1 // pred_fallthru
      _
    // Predicated region
    $region14: #{tpu_custom_call.1} parent=1 // pred_check
      _
    $region15: #{tpu_custom_call.1} parent=1 // pred_check_branch
      %38 = sbr.rel (0) target = $region17
    $region16: #{tpu_custom_call.1} parent=1 // pred_region
      %40 = dma.done [#allocation4], 128
    $region17: #{tpu_custom_call.1} parent=1 // pred_fallthru
      _
    // Predicated region
    $region18: #{tpu_custom_call.1} parent=1 // pred_check
      _
    $region19: #{tpu_custom_call.1} parent=1 // pred_check_branch
      %42 = sbr.rel (0) target = $region21
    $region20: #{tpu_custom_call.1} parent=1 // pred_region
      %44 = dma.done [#allocation7], 2048
    $region21: #{tpu_custom_call.1} parent=1 // pred_fallthru
      _
    %p45 = scmp.eq.s32.totalorder 0, 0
    // Predicated region
    $region22: #{tpu_custom_call.1} parent=1 // pred_check
      %p46 = pneg %p45
    $region23: #{tpu_custom_call.1} parent=1 // pred_check_branch
      %48 = sbr.rel (%p46) target = $region25
    $region24: #{tpu_custom_call.1} parent=1 // pred_region
      %v49 = vld [vmem:[%s2] sm:$0x1]
      %v51 = vperm.slane %v49, 0
      %53 = vst [vmem:[#allocation2] sm:$0xff] %v51
    $region25: #{tpu_custom_call.1} parent=1 // pred_fallthru
      _
    %v54 = vld [vmem:[#allocation2] sm:$0xff]
    %v55 = vld [vmem:[#allocation3] sm:$0xff]
    %v56 = vld [vmem:[#allocation6] sm:$0xf]
    %v57 = vld [vmem:[#allocation6 + $0x4] sm:$0xf]
    %v58 = vld [vmem:[#allocation6 + $0x8] sm:$0xf]
    %v59 = vld [vmem:[#allocation6 + $0xc] sm:$0xf]
    %v60 = vld [vmem:[#allocation6 + $0x10] sm:$0xf]
    %v61 = vld [vmem:[#allocation6 + $0x14] sm:$0xf]
    %v62 = vld [vmem:[#allocation6 + $0x18] sm:$0xf]
    %v63 = vld [vmem:[#allocation6 + $0x1c] sm:$0xf]
    %v64 = vld [vmem:[#allocation6 + $0x20] sm:$0xf]
    %v65 = vld [vmem:[#allocation6 + $0x24] sm:$0xf]
    %v66 = vld [vmem:[#allocation6 + $0x28] sm:$0xf]
    %v67 = vld [vmem:[#allocation6 + $0x2c] sm:$0xf]
    %v68 = vld [vmem:[#allocation6 + $0x30] sm:$0xf]
    %v69 = vld [vmem:[#allocation6 + $0x34] sm:$0xf]
    %v70 = vld [vmem:[#allocation6 + $0x38] sm:$0xf]
    %v71 = vld [vmem:[#allocation6 + $0x3c] sm:$0xf]
    %v72 = vld [vmem:[#allocation6 + $0x40] sm:$0xf]
    %v73 = vld [vmem:[#allocation6 + $0x44] sm:$0xf]
    %v74 = vld [vmem:[#allocation6 + $0x48] sm:$0xf]
    %v75 = vld [vmem:[#allocation6 + $0x4c] sm:$0xf]
    %v76 = vld [vmem:[#allocation6 + $0x50] sm:$0xf]
    %v77 = vld [vmem:[#allocation6 + $0x54] sm:$0xf]
    %v78 = vld [vmem:[#allocation6 + $0x58] sm:$0xf]
    %v79 = vld [vmem:[#allocation6 + $0x5c] sm:$0xf]
    %v80 = vld [vmem:[#allocation6 + $0x60] sm:$0xf]
    %v81 = vld [vmem:[#allocation6 + $0x64] sm:$0xf]
    %v82 = vld [vmem:[#allocation6 + $0x68] sm:$0xf]
    %v83 = vld [vmem:[#allocation6 + $0x6c] sm:$0xf]
    %v84 = vld [vmem:[#allocation6 + $0x70] sm:$0xf]
    %v85 = vld [vmem:[#allocation6 + $0x74] sm:$0xf]
    %v86 = vld [vmem:[#allocation6 + $0x78] sm:$0xf]
    %v87 = vld [vmem:[#allocation6 + $0x7c] sm:$0xf]
    %v89 = vunpack.c.l.b16 %v55
    %v90 = vunpack.c.h.b16 %v55
    %v91 = vpack.c.b16 %v89, %v89
    %v92 = vpack.c.b16 %v90, %v90
    %v127 = vunpack.c.l.b16 %v56
    %v128 = vunpack.c.l.b16 %v57
    %v129 = vunpack.c.l.b16 %v58
    %v130 = vunpack.c.l.b16 %v59
    %v131 = vunpack.c.l.b16 %v60
    %v132 = vunpack.c.l.b16 %v61
    %v133 = vunpack.c.l.b16 %v62
    %v134 = vunpack.c.l.b16 %v63
    %v135 = vunpack.c.l.b16 %v64
    %v136 = vunpack.c.l.b16 %v65
    %v137 = vunpack.c.l.b16 %v66
    %v138 = vunpack.c.l.b16 %v67
    %v139 = vunpack.c.l.b16 %v68
    %v140 = vunpack.c.l.b16 %v69
    %v141 = vunpack.c.l.b16 %v70
    %v142 = vunpack.c.l.b16 %v71
    %v143 = vunpack.c.l.b16 %v72
    %v144 = vunpack.c.l.b16 %v73
    %v145 = vunpack.c.l.b16 %v74
    %v146 = vunpack.c.l.b16 %v75
    %v147 = vunpack.c.l.b16 %v76
    %v148 = vunpack.c.l.b16 %v77
    %v149 = vunpack.c.l.b16 %v78
    %v150 = vunpack.c.l.b16 %v79
    %v151 = vunpack.c.l.b16 %v80
    %v152 = vunpack.c.l.b16 %v81
    %v153 = vunpack.c.l.b16 %v82
    %v154 = vunpack.c.l.b16 %v83
    %v155 = vunpack.c.l.b16 %v84
    %v156 = vunpack.c.l.b16 %v85
    %v157 = vunpack.c.l.b16 %v86
    %v158 = vunpack.c.l.b16 %v87
    %v159 = vpack.c.b16 %v128, %v127
    %v160 = vpack.c.b16 %v130, %v129
    %v161 = vpack.c.b16 %v132, %v131
    %v162 = vpack.c.b16 %v134, %v133
    %v163 = vpack.c.b16 %v136, %v135
    %v164 = vpack.c.b16 %v138, %v137
    %v165 = vpack.c.b16 %v140, %v139
    %v166 = vpack.c.b16 %v142, %v141
    %v167 = vpack.c.b16 %v144, %v143
    %v168 = vpack.c.b16 %v146, %v145
    %v169 = vpack.c.b16 %v148, %v147
    %v170 = vpack.c.b16 %v150, %v149
    %v171 = vpack.c.b16 %v152, %v151
    %v172 = vpack.c.b16 %v154, %v153
    %v173 = vpack.c.b16 %v156, %v155
    %v174 = vpack.c.b16 %v158, %v157
    %191 = vmatpush.bf16.msra.mxu0 %v166
    %192 = vmatpush.bf16.msra.mxu0 %v165
    %193 = vmatpush.bf16.msra.mxu0 %v164
    %194 = vmatpush.bf16.msra.mxu0 %v163
    %195 = vmatpush.bf16.msra.mxu0 %v162
    %196 = vmatpush.bf16.msra.mxu0 %v161
    %197 = vmatpush.bf16.msra.mxu0 %v160
    %198 = vmatpush.bf16.msra.mxu0 %v159
    %199 = vmatmul.bf16.gmra.mxu0 %v91
    %v200 = vpop.f32.mrf.mxu0
    %v201 = vadd.f32 0.0, %v200
    %v202 = vpop.f32.mrf.mxu0
    %203 = vdwg.mxu0
    %204 = vmatpush.bf16.msra.mxu0 %v174
    %205 = vmatpush.bf16.msra.mxu0 %v173
    %206 = vmatpush.bf16.msra.mxu0 %v172
    %207 = vmatpush.bf16.msra.mxu0 %v171
    %208 = vmatpush.bf16.msra.mxu0 %v170
    %209 = vmatpush.bf16.msra.mxu0 %v169
    %210 = vmatpush.bf16.msra.mxu0 %v168
    %211 = vmatpush.bf16.msra.mxu0 %v167
    %212 = vmatmul.bf16.gmra.mxu0 %v92
    %v213 = vpop.f32.mrf.mxu0
    %v214 = vadd.f32 %v201, %v213
    %v215 = vpop.f32.mrf.mxu0
    %216 = vdwg.mxu0
    %v217 = vadd.f32 %v54, %v214
    %218 = vst [vmem:[#allocation2] sm:$0xff] %v217
    // Predicated region
    $region26: #{tpu_custom_call.1} parent=1 // pred_check
      %p219 = pneg %p45
    $region27: #{tpu_custom_call.1} parent=1 // pred_check_branch
      %221 = sbr.rel (%p219) target = $region29
    $region28: #{tpu_custom_call.1} parent=1 // pred_region
      %v222 = vld [vmem:[#allocation2] sm:$0xff]
      %v223 = vpack.c.bf16 %v222, %v222
      %224 = vst [vmem:[#allocation8] sm:$0xf] %v223
    $region29: #{tpu_custom_call.1} parent=1 // pred_fallthru
      _
    // Predicated region
    $region30: #{tpu_custom_call.1} parent=1 // pred_check
      _
    $region31: #{tpu_custom_call.1} parent=1 // pred_check_branch
      %226 = sbr.rel (0) target = $region33
    $region32: #{tpu_custom_call.1} parent=1 // pred_region
      %228 = vsyncadd [#allocation5], 0
      %s230 = sshll.u32 [#allocation8], 4
      %s231 = int_to_ptr.vmem [resolvable:$true] %s230
      %s232 = sshll.u32 %s3, 4
      %s233 = int_to_ptr.hbm [resolvable:$true] %s232
      %235 = dma.vmem_to_hbm [thread:$0]  %s231, 64, %s233, [#allocation5]
    $region33: #{tpu_custom_call.1} parent=1 // pred_fallthru
      _
    // Predicated region
    $region34: #{tpu_custom_call.1} parent=1 // pred_check
      _
    $region35: #{tpu_custom_call.1} parent=1 // pred_check_branch
      %237 = sbr.rel (0) target = $region37
    $region36: #{tpu_custom_call.1} parent=1 // pred_region
      %239 = dma.done [#allocation5], 64
    $region37: #{tpu_custom_call.1} parent=1 // pred_fallthru
      _
    %240 = vsyncpa [#allocation4], 1
    %241 = vsyncpa [#allocation7], 1
    %242 = vsyncpa [#allocation5], 1

</llo_original>
